<compile_context>
chip_gen: v7x
topology: tpu7x:2x2x1
jax: 0.10.0
libtpu: 0.0.40
codegen_flags: <defaults>
</compile_context>

<pallas_src>
import functools

import jax
import jax.numpy as jnp
from jax import lax
from jax.experimental import pallas as pl
from jax.experimental.pallas import tpu as pltpu


def _round_up(x, m):
    return ((x + m - 1) // m) * m


def _vmem_caps():
    """Generation-aware (working-set budget, scoped-VMEM limit) in bytes."""
    try:
        phys = int(pltpu.get_tpu_info().vmem_capacity_bytes)
    except Exception:
        phys = 64 * 1024 * 1024  # conservative (v7x-sized) fallback
    budget = min(phys * 2 // 5, 48 * 1024 * 1024)   # tile-sizing budget
    limit = min(phys * 3 // 4, 100 * 1024 * 1024)   # requested scoped limit
    return budget, limit


def _bytes_per_pixel(c, logits_itemsize):
    # Double-buffered inputs (logits in native dtype + int32 targets), ~6 live
    # channel-sized f32/int32 temporaries (f32 upcast, x-m, exp, iota, one-hot
    # select result, ...) and ~10 pixel-sized f32 temporaries.
    return 2 * (c * logits_itemsize + 4) + 6 * 4 * c + 10 * 4


def _choose_block_rows(n_rows, c, logits_itemsize, budget, max_rows=1024):
    """Rows (of 128 pixels) per grid step; multiple of 8 unless the image is tiny."""
    if n_rows < 8:
        return n_rows                      # block dim == full array dim (allowed)
    bpp = _bytes_per_pixel(c, logits_itemsize)
    cap = budget // (128 * bpp)
    rows = min(max_rows, (n_rows // 8) * 8, (cap // 8) * 8)
    return max(8, rows)


def _focal_loss_kernel(logits_ref, targets_ref, out_ref, *,
                       gamma, hw, block_rows, needs_mask):
    # logits_ref:  (1, C, R, 128)  targets_ref: (1, 1, R, 128) int32
    # out_ref:     (1, 1, min(R,8), 128) f32 per-(batch, pixel-block) partial sums
    x = logits_ref[...].astype(jnp.float32)            # (1, C, R, 128)
    t = targets_ref[...]                                # (1, 1, R, 128)
    _, c, r, lanes = x.shape

    # log-softmax pieces over the channel axis; channels are separate dense
    # vreg tiles, so max/sum over them are cross-vreg VPU ops (no XLU).
    m = jnp.max(x, axis=1, keepdims=True)               # (1, 1, R, 128)
    ex = jnp.exp(x - m)                                  # C EUP exps / pixel
    denom = jnp.sum(ex, axis=1, keepdims=True)
    lse = m + jnp.log(denom)                             # 1 EUP log / pixel

    # Target-class logit via one-hot compare (no dynamic gather on TPU).
    class_ids = lax.broadcasted_iota(jnp.int32, x.shape, 1)
    logit_t = jnp.sum(jnp.where(class_ids == t, x, 0.0), axis=1, keepdims=True)

    ce = lse - logit_t                                   # -log p_target
    p = jnp.exp(-ce)                                     # exact p_target (1 EUP exp)
    one_minus_p = 1.0 - p

    g = float(gamma)
    if g == 0.0:
        factor = jnp.ones_like(one_minus_p)
    elif g == int(g) and 0 < int(g) <= 8:
        # Integer gamma (the common case, gamma=2): plain VALU multiplies.
        factor = one_minus_p
        for _ in range(int(g) - 1):
            factor = factor * one_minus_p
    else:
        factor = jnp.power(one_minus_p, g)

    focal = factor * ce                                  # alpha applied in wrapper

    if needs_mask:
        # Only emitted when wrapper padding or a partial last block exists.
        j = pl.program_id(1)
        row = lax.broadcasted_iota(jnp.int32, focal.shape, 2)
        lane = lax.broadcasted_iota(jnp.int32, focal.shape, 3)
        gpix = (j * block_rows + row) * lanes + lane
        focal = jnp.where(gpix < hw, focal, 0.0)

    if r < 8:
        out_ref[...] = focal
    else:
        # Fold the R sublane-rows down to one dense (8, 128) slab with pure
        # cross-vreg VPU adds (the reshape only splits the sublane axis).
        out_ref[...] = jnp.sum(
            focal.reshape(r // 8, 8, lanes), axis=0).reshape(1, 1, 8, lanes)


def focal_loss(logits, targets, *, alpha=0.25, gamma=2.0, weight=None,
               reduction="mean", block_rows=None):
    """logits: [B, C, H, W] float; targets: [B, H, W] int. Matches PyTorch FocalLoss."""
    if weight is not None:
        # TODO(synk): per-class CE weights (weight[target] scaling) not implemented.
        raise NotImplementedError("per-class `weight` not supported by this kernel")

    B, C, H, W = logits.shape
    HW = H * W
    N = B * HW

    budget, vmem_limit = _vmem_caps()
    HW_pad = _round_up(HW, 128)
    n_rows = HW_pad // 128

    if block_rows is None:
        block_rows = _choose_block_rows(n_rows, C, jnp.dtype(logits.dtype).itemsize,
                                        budget)
    block_rows = int(block_rows)
    n_blocks = pl.cdiv(n_rows, block_rows)
    out_rows = block_rows if block_rows < 8 else 8
    needs_mask = (n_blocks * block_rows * 128 != HW)

    # NCHW kept as-is (logits stay in their native dtype in HBM; upcast in-kernel).
    x = logits.reshape(B, C, HW)
    t = targets.reshape(B, HW).astype(jnp.int32)
    if HW_pad != HW:
        pad = HW_pad - HW
        x = jnp.pad(x, ((0, 0), (0, 0), (0, pad)))
        t = jnp.pad(t, ((0, 0), (0, pad)))
    x = x.reshape(B, C, n_rows, 128)
    t = t.reshape(B, 1, n_rows, 128)

    kernel = functools.partial(_focal_loss_kernel, gamma=float(gamma), hw=HW,
                               block_rows=block_rows, needs_mask=needs_mask)

    partials = pl.pallas_call(
        kernel,
        out_shape=jax.ShapeDtypeStruct((B, n_blocks, out_rows, 128), jnp.float32),
        grid_spec=pltpu.PrefetchScalarGridSpec(
            num_scalar_prefetch=0,
            grid=(B, n_blocks),
            in_specs=[
                pl.BlockSpec((1, C, block_rows, 128), lambda b, j: (b, 0, j, 0)),
                pl.BlockSpec((1, 1, block_rows, 128), lambda b, j: (b, 0, j, 0)),
            ],
            out_specs=pl.BlockSpec((1, 1, out_rows, 128), lambda b, j: (b, j, 0, 0)),
        ),
        compiler_params=pltpu.CompilerParams(
            dimension_semantics=("parallel", "parallel"),
            vmem_limit_bytes=vmem_limit,
        ),
    )(x, t)

    total = jnp.float32(alpha) * jnp.sum(partials, dtype=jnp.float32)
    if reduction == "mean":
        return total / jnp.float32(N)
    elif reduction == "sum":
        return total
    else:
        # TODO(synk): reduction='none' (per-pixel loss map) is not produced by
        # this partial-sum kernel; only the aggregate reductions are supported.
        raise NotImplementedError("reduction='none' not implemented in the Pallas kernel")


def _focal_loss_ref(logits, targets, alpha=0.25, gamma=2.0):
    # Pure-JAX reference mirroring the torch module (for correctness check).
    logp = jax.nn.log_softmax(logits.astype(jnp.float32), axis=1)       # [B,C,H,W]
    t = targets[:, None, :, :]                                          # [B,1,H,W]
    logp_t = jnp.take_along_axis(logp, t, axis=1)[:, 0]                 # [B,H,W]
    ce = -logp_t
    p = jnp.exp(logp_t)
    fl = alpha * (1.0 - p) ** gamma * ce
    return fl.mean()


if __name__ == "__main__":
    key = jax.random.PRNGKey(0)
    k1, k2, k3, k4 = jax.random.split(key, 4)

    # Main check: B=2, C=4, 16x16 spatial (HW multiple of 128, no padding path).
    B, C, H, W = 2, 4, 16, 16
    logits = jax.random.normal(k1, (B, C, H, W), dtype=jnp.float32)
    targets = jax.random.randint(k2, (B, H, W), 0, C, dtype=jnp.int32)

    out = focal_loss(logits, targets, alpha=0.25, gamma=2.0, reduction="mean")
    out = jax.block_until_ready(out)
    ref = _focal_loss_ref(logits, targets)
    assert jnp.allclose(out, ref, rtol=1e-3, atol=1e-6), (out, ref)

    # Second check: spatial size not a multiple of 128 (exercises the wrapper
    # pad + in-kernel validity mask).
    B2, C2, H2, W2 = 2, 4, 10, 10
    logits2 = jax.random.normal(k3, (B2, C2, H2, W2), dtype=jnp.float32)
    targets2 = jax.random.randint(k4, (B2, H2, W2), 0, C2, dtype=jnp.int32)

    out2 = focal_loss(logits2, targets2, alpha=0.25, gamma=2.0, reduction="mean")
    out2 = jax.block_until_ready(out2)
    ref2 = _focal_loss_ref(logits2, targets2)
    assert jnp.allclose(out2, ref2, rtol=1e-3, atol=1e-6), (out2, ref2)

    print("KERNEL_OK")
</pallas_src>

<mosaic_0001>
module attributes {stable_mosaic.version = 11 : i64} {
  func.func @_focal_loss_kernel(%arg0: i32, %arg1: i32, %arg2: memref<1x4x2x128xf32, #tpu.memory_space<vmem>>, %arg3: memref<1x1x2x128xi32, #tpu.memory_space<vmem>>, %arg4: memref<1x1x2x128xf32, #tpu.memory_space<vmem>>) attributes {dimension_semantics = [#tpu.dimension_semantics<parallel>, #tpu.dimension_semantics<parallel>], iteration_bounds = array<i64: 2, 1>, scalar_prefetch = 0 : i64, scratch_operands = 0 : i64, tpu.core_type = #tpu.core_type<tc>, window_params = [{transform_indices = @transform_0, window_bounds = array<i64: 1, 4, 2, 128>}, {transform_indices = @transform_1, window_bounds = array<i64: 1, 1, 2, 128>}, {transform_indices = @transform_2, window_bounds = array<i64: 1, 1, 2, 128>}]} {
    %c0 = arith.constant 0 : index
    %c0_0 = arith.constant 0 : index
    %c0_1 = arith.constant 0 : index
    %c0_2 = arith.constant 0 : index
    %0 = vector.load %arg2[%c0, %c0_0, %c0_1, %c0_2] : memref<1x4x2x128xf32, #tpu.memory_space<vmem>>, vector<1x4x2x128xf32>
    %c0_3 = arith.constant 0 : index
    %c0_4 = arith.constant 0 : index
    %c0_5 = arith.constant 0 : index
    %c0_6 = arith.constant 0 : index
    %1 = vector.load %arg3[%c0_3, %c0_4, %c0_5, %c0_6] : memref<1x1x2x128xi32, #tpu.memory_space<vmem>>, vector<1x1x2x128xi32>
    %cst = arith.constant dense<0xFF800000> : vector<1x2x128xf32>
    %2 = vector.multi_reduction <maximumf>, %0, %cst [1] : vector<1x4x2x128xf32> to vector<1x2x128xf32>
    %3 = vector.shape_cast %2 : vector<1x2x128xf32> to vector<1x1x2x128xf32>
    %4 = vector.broadcast %3 : vector<1x1x2x128xf32> to vector<1x4x2x128xf32>
    %5 = arith.subf %0, %4 : vector<1x4x2x128xf32>
    %6 = math.exp %5 : vector<1x4x2x128xf32>
    %cst_7 = arith.constant dense<0.000000e+00> : vector<1x2x128xf32>
    %7 = vector.multi_reduction <add>, %6, %cst_7 [1] : vector<1x4x2x128xf32> to vector<1x2x128xf32>
    %8 = vector.shape_cast %7 : vector<1x2x128xf32> to vector<1x1x2x128xf32>
    %9 = math.log %8 : vector<1x1x2x128xf32>
    %10 = arith.addf %3, %9 : vector<1x1x2x128xf32>
    %11 = tpu.iota {dimensions = array<i32: 1>} : vector<1x4x2x128xi32>
    %12 = vector.broadcast %1 : vector<1x1x2x128xi32> to vector<1x4x2x128xi32>
    %13 = arith.cmpi eq, %11, %12 : vector<1x4x2x128xi32>
    %cst_8 = arith.constant 0.000000e+00 : f32
    %14 = vector.broadcast %cst_8 : f32 to vector<1x4x2x128xf32>
    %15 = arith.select %13, %0, %14 : vector<1x4x2x128xi1>, vector<1x4x2x128xf32>
    %cst_9 = arith.constant dense<0.000000e+00> : vector<1x2x128xf32>
    %16 = vector.multi_reduction <add>, %15, %cst_9 [1] : vector<1x4x2x128xf32> to vector<1x2x128xf32>
    %17 = vector.shape_cast %16 : vector<1x2x128xf32> to vector<1x1x2x128xf32>
    %18 = arith.subf %10, %17 : vector<1x1x2x128xf32>
    %cst_10 = arith.constant 0.000000e+00 : f32
    %19 = vector.broadcast %cst_10 : f32 to vector<1x1x2x128xf32>
    %20 = arith.subf %19, %18 : vector<1x1x2x128xf32>
    %21 = math.exp %20 : vector<1x1x2x128xf32>
    %cst_11 = arith.constant 1.000000e+00 : f32
    %22 = vector.broadcast %cst_11 : f32 to vector<1x1x2x128xf32>
    %23 = arith.subf %22, %21 : vector<1x1x2x128xf32>
    %24 = arith.mulf %23, %23 : vector<1x1x2x128xf32>
    %25 = arith.mulf %24, %18 : vector<1x1x2x128xf32>
    %c0_12 = arith.constant 0 : index
    %c0_13 = arith.constant 0 : index
    %c0_14 = arith.constant 0 : index
    %c0_15 = arith.constant 0 : index
    %26 = vector.load %arg4[%c0_12, %c0_13, %c0_14, %c0_15] : memref<1x1x2x128xf32, #tpu.memory_space<vmem>>, vector<1x1x2x128xf32>
    tpu.vector_store %arg4[%c0_12, %c0_13, %c0_14, %c0_15], %25 {strides = array<i32>} : memref<1x1x2x128xf32, #tpu.memory_space<vmem>>, vector<1x1x2x128xf32>,
    return
  }
  func.func @transform_0(%arg0: i32, %arg1: i32) -> (i32, i32, i32, i32) {
    %c0_i32 = arith.constant 0 : i32
    %c0_i32_0 = arith.constant 0 : i32
    %c0_i32_1 = arith.constant 0 : i32
    return %arg0, %c0_i32, %arg1, %c0_i32_0 : i32, i32, i32, i32
  }
  func.func @transform_1(%arg0: i32, %arg1: i32) -> (i32, i32, i32, i32) {
    %c0_i32 = arith.constant 0 : i32
    %c0_i32_0 = arith.constant 0 : i32
    %c0_i32_1 = arith.constant 0 : i32
    return %arg0, %c0_i32, %arg1, %c0_i32_0 : i32, i32, i32, i32
  }
  func.func @transform_2(%arg0: i32, %arg1: i32) -> (i32, i32, i32, i32) {
    %c0_i32 = arith.constant 0 : i32
    %c0_i32_0 = arith.constant 0 : i32
    %c0_i32_1 = arith.constant 0 : i32
    return %arg0, %arg1, %c0_i32, %c0_i32_0 : i32, i32, i32, i32
  }
}

</mosaic_0001>

<llo_original>
// kernel: tpu_custom_call.1
$region0: #{tpu_custom_call.1}
  #allocation0 [shape = 'u32[]', space=smem, size = 0x4, offset = 0x4, fixed_abs, tag = 'smem constant byte address 0x4 - core index']
  #allocation1 [shape = 'u32[144,128]{1,0:T(1,128)}', space=vmem, size = 0x12000, scoped, tag = 'internal scratch']
  %s0 = inlined_call_operand.hbm [shape: f32[2,4,2,128], index: 0, kind: input, shape index: {}]
  %s1 = inlined_call_operand.hbm [shape: s32[2,1,2,128], index: 1, kind: input, shape index: {}]
  %s2 = inlined_call_operand.hbm [shape: f32[2,1,2,128], index: 2, kind: output, shape index: {}]
  %s3 = sld [smem:[#allocation0]]
  $region49: #{tpu_custom_call.1} parent=0
    _
  %s5 = ssub.s32 1, %s3
  %s6 = scalar_select 0, %s5, %s3
  $region1: #{tpu_custom_call.1} parent=0
    #allocation2 [shape = 'u8[8192]{0}', space=vmem, size = 0x2000, scoped, tag = 'input window, operand 0']
    #allocation3 [shape = 's32[2]{0}', space=sflag, size = 0x8, scoped, tag = 'scoped memory for tpu_custom_call.1']
    #allocation4 [shape = 's32[2]{0}', space=sflag, size = 0x8, scoped, tag = 'scoped memory for tpu_custom_call.1']
    #allocation5 [shape = 'u8[2048]{0}', space=vmem, size = 0x800, scoped, tag = 'input window, operand 1']
    #allocation6 [shape = 's32[2]{0}', space=sflag, size = 0x8, scoped, tag = 'scoped memory for tpu_custom_call.1']
    #allocation7 [shape = 'u8[2048]{0}', space=vmem, size = 0x800, scoped, tag = 'output window, operand 0']
    %7 = vsyncpa [#allocation3], 0
    %s8 = scalar_lea.sflag [#allocation3], 1
    %9 = vsyncpa %s8, 0
    %10 = vsyncpa [#allocation6], 0
    %s11 = scalar_lea.sflag [#allocation6], 1
    %12 = vsyncpa %s11, 0
    %13 = vsyncpa [#allocation4], 0
    %s14 = scalar_lea.sflag [#allocation4], 1
    %15 = vsyncpa %s14, 0
    loop: start=0, step=1, limit=4
    $region2: #{tpu_custom_call.1} parent=1 // loop_pre_header
      _
    $region3: #{tpu_custom_call.1} parent=1 // loop_header
      %s17 = sphi 0, %s21
      %p18 = scmp.ge.s32.totalorder %s17, 4
      %s24 = sphi 0, %s36
      %s25 = sphi 0, %s32
      %s26 = sphi 0, %s24
      %s27 = sphi 0, %s25
      %s28 = sphi 0, %s26
      %s29 = sphi 0, %s27
      %s41 = sphi 0, %s43
      %s44 = sphi 0, %s41
      %s45 = sphi 0, %s44
      %s61 = sphi 0, %s45
      %s69 = sphi 0, %s71
      %s72 = sphi 0, %s69
      %s73 = sphi 0, %s72
      %s89 = sphi 0, %s73
      %s97 = sphi 0, %s99
      %s100 = sphi 0, %s97
      %s101 = sphi 0, %s100
      %s117 = sphi 0, %s101
    $region4: #{tpu_custom_call.1} parent=1 // loop_header_branch
      %20 = sbr.rel (%p18) target = $region8
    $region5: #{tpu_custom_call.1} parent=1 // loop_body
      %s22 = ssub.s32 %s17, 1
      %s23 = ssub.s32 %s17, 2
      %s30 = sadd.s32 1, %s25
      %p31 = scmp.ge.s32.totalorder %s30, 1
      %s32 = scalar_select %p31, 0, %s30
      %s33 = sadd.s32 1, %s24
      %s34 = scalar_select %p31, %s33, %s24
      %p35 = scmp.ge.s32.totalorder %s34, 2
      %s36 = scalar_select %p35, 0, %s34
      %s37 = ssub.s32 %s24, %s36
      %s38 = ssub.s32 %s25, %s32
      %s39 = sor.u32 %s37, %s38
      %p40 = scmp.eq.s32.totalorder %s39, 0
      %s42 = sadd.s32 %s41, 1
      %s43 = scalar_select %p40, %s41, %s42
      %p46 = pneg %p40
      %p47 = scmp.eq.s32.totalorder %s17, 1
      %p48 = por %p46, %p47
      %p49 = scmp.ne.s32.totalorder %s41, %s44
      %p50 = scmp.eq.s32.totalorder %s17, 0
      %p51 = por %p49, %p50
      %p52 = scmp.ne.s32.totalorder %s41, %s44
      %p53 = scmp.eq.s32.totalorder %s22, 1
      %p54 = por %p52, %p53
      %p55 = scmp.ne.s32.totalorder %s44, %s45
      %p56 = scmp.eq.s32.totalorder %s22, 0
      %p57 = por %p55, %p56
      %p58 = scmp.ne.s32.totalorder %s44, %s45
      %p59 = scmp.eq.s32.totalorder %s23, 1
      %p60 = por %p58, %p59
      %p62 = scmp.ne.s32.totalorder %s45, %s61
      %p63 = scmp.eq.s32.totalorder %s23, 0
      %p64 = por %p62, %p63
      %s65 = ssub.s32 %s24, %s36
      %s66 = ssub.s32 %s25, %s32
      %s67 = sor.u32 %s65, %s66
      %p68 = scmp.eq.s32.totalorder %s67, 0
      %s70 = sadd.s32 %s69, 1
      %s71 = scalar_select %p68, %s69, %s70
      %p74 = pneg %p68
      %p75 = scmp.eq.s32.totalorder %s17, 1
      %p76 = por %p74, %p75
      %p77 = scmp.ne.s32.totalorder %s69, %s72
      %p78 = scmp.eq.s32.totalorder %s17, 0
      %p79 = por %p77, %p78
      %p80 = scmp.ne.s32.totalorder %s69, %s72
      %p81 = scmp.eq.s32.totalorder %s22, 1
      %p82 = por %p80, %p81
      %p83 = scmp.ne.s32.totalorder %s72, %s73
      %p84 = scmp.eq.s32.totalorder %s22, 0
      %p85 = por %p83, %p84
      %p86 = scmp.ne.s32.totalorder %s72, %s73
      %p87 = scmp.eq.s32.totalorder %s23, 1
      %p88 = por %p86, %p87
      %p90 = scmp.ne.s32.totalorder %s73, %s89
      %p91 = scmp.eq.s32.totalorder %s23, 0
      %p92 = por %p90, %p91
      %s93 = ssub.s32 %s24, %s36
      %s94 = ssub.s32 %s25, %s32
      %s95 = sor.u32 %s93, %s94
      %p96 = scmp.eq.s32.totalorder %s95, 0
      %s98 = sadd.s32 %s97, 1
      %s99 = scalar_select %p96, %s97, %s98
      %p102 = pneg %p96
      %p103 = scmp.eq.s32.totalorder %s17, 1
      %p104 = por %p102, %p103
      %p105 = scmp.ne.s32.totalorder %s97, %s100
      %p106 = scmp.eq.s32.totalorder %s17, 0
      %p107 = por %p105, %p106
      %p108 = scmp.ne.s32.totalorder %s97, %s100
      %p109 = scmp.eq.s32.totalorder %s22, 1
      %p110 = por %p108, %p109
      %p111 = scmp.ne.s32.totalorder %s100, %s101
      %p112 = scmp.eq.s32.totalorder %s22, 0
      %p113 = por %p111, %p112
      %p114 = scmp.ne.s32.totalorder %s100, %s101
      %p115 = scmp.eq.s32.totalorder %s23, 1
      %p116 = por %p114, %p115
      %p118 = scmp.ne.s32.totalorder %s101, %s117
      %p119 = scmp.eq.s32.totalorder %s23, 0
      %p120 = por %p118, %p119
      %p121 = scmp.le.s32.totalorder 1, %s17
      %p122 = scmp.lt.s32.totalorder %s17, 3
      %p123 = pnand %p121, %p122
      %p124 = pneg %p123
      // Predicated region
      $region9: #{tpu_custom_call.1} parent=5 // pred_check
        _
      $region10: #{tpu_custom_call.1} parent=5 // pred_check_branch
        %126 = sbr.rel (%p123) target = $region12
      $region11: #{tpu_custom_call.1} parent=5 // pred_region
        %s127 = ssub.s32 %s17, 1
      $region12: #{tpu_custom_call.1} parent=5 // pred_fallthru
        _
      %p128 = scmp.lt.s32.totalorder %s17, 2
      // Predicated region
      $region13: #{tpu_custom_call.1} parent=5 // pred_check
        %p129 = pneg %p128
      $region14: #{tpu_custom_call.1} parent=5 // pred_check_branch
        %131 = sbr.rel (%p129) target = $region16
      $region15: #{tpu_custom_call.1} parent=5 // pred_region
        // Predicated region
        $region17: #{tpu_custom_call.1} parent=15 // pred_check
          %p132 = pneg %p51
        $region18: #{tpu_custom_call.1} parent=15 // pred_check_branch
          %134 = sbr.rel (%p132) target = $region20
        $region19: #{tpu_custom_call.1} parent=15 // pred_region
          %s135 = sand.u32 %s41, 1
          %s136 = scalar_lea.sflag [#allocation3], %s135
          %s137 = sand.u32 %s41, 1
          %s138 = smul.addr %s137, 8
          %s139 = scalar_lea.vmem [#allocation2], %s138
          %s141 = ssub.s32 128, 128
          %142 = vsyncadd %s136, %s141
          %s143 = smul.addr %s24, 4
          %s144 = sadd.s32 %s25, %s143
          %s145 = smul.addr %s144, 32
          %s146 = scalar_lea.hbm %s0, %s145
          %s147 = sshll.u32 %s139, 4
          %s148 = int_to_ptr.vmem [resolvable:$true] %s147
          %153 = dma.hbm_to_vmem [thread:$0]  %s146, 128, %s148, %s136, 32, 32, 2
        $region20: #{tpu_custom_call.1} parent=15 // pred_fallthru
          _
        // Predicated region
        $region21: #{tpu_custom_call.1} parent=15 // pred_check
          %p154 = pneg %p79
        $region22: #{tpu_custom_call.1} parent=15 // pred_check_branch
          %156 = sbr.rel (%p154) target = $region24
        $region23: #{tpu_custom_call.1} parent=15 // pred_region
          %s157 = sand.u32 %s69, 1
          %s158 = scalar_lea.sflag [#allocation6], %s157
          %s159 = sand.u32 %s69, 1
          %s160 = smul.addr %s159, 2
          %s161 = scalar_lea.vmem [#allocation5], %s160
          %s163 = ssub.s32 32, 32
          %164 = vsyncadd %s158, %s163
          %s165 = sadd.s32 %s25, %s24
          %s166 = smul.addr %s165, 32
          %s167 = scalar_lea.hbm %s1, %s166
          %s169 = sshll.u32 %s161, 4
          %s170 = int_to_ptr.vmem [resolvable:$true] %s169
          %172 = dma.hbm_to_vmem [thread:$0]  %s167, 32, %s170, %s158
        $region24: #{tpu_custom_call.1} parent=15 // pred_fallthru
          _
      $region16: #{tpu_custom_call.1} parent=5 // pred_fallthru
        _
      %p173 = scmp.le.s32.totalorder 1, %s17
      %p174 = scmp.lt.s32.totalorder %s17, 3
      %p175 = pnand %p173, %p174
      %p176 = pneg %p175
      // Predicated region
      $region25: #{tpu_custom_call.1} parent=5 // pred_check
        _
      $region26: #{tpu_custom_call.1} parent=5 // pred_check_branch
        %178 = sbr.rel (%p175) target = $region28
      $region27: #{tpu_custom_call.1} parent=5 // pred_region
        %s179 = ssub.s32 %s17, 1
        %s180 = sand.u32 %s44, 1
        %s181 = scalar_lea.sflag [#allocation3], %s180
        %s182 = sand.u32 %s44, 1
        %s183 = smul.addr %s182, 8
        %s184 = scalar_lea.vmem [#allocation2], %s183
        // Predicated region
        $region29: #{tpu_custom_call.1} parent=27 // pred_check
          %p185 = pneg %p57
        $region30: #{tpu_custom_call.1} parent=27 // pred_check_branch
          %187 = sbr.rel (%p185) target = $region32
        $region31: #{tpu_custom_call.1} parent=27 // pred_region
          %188 = dma.done %s181, 128
        $region32: #{tpu_custom_call.1} parent=27 // pred_fallthru
          _
        %s189 = sand.u32 %s72, 1
        %s190 = scalar_lea.sflag [#allocation6], %s189
        %s191 = sand.u32 %s72, 1
        %s192 = smul.addr %s191, 2
        %s193 = scalar_lea.vmem [#allocation5], %s192
        // Predicated region
        $region33: #{tpu_custom_call.1} parent=27 // pred_check
          %p194 = pneg %p85
        $region34: #{tpu_custom_call.1} parent=27 // pred_check_branch
          %196 = sbr.rel (%p194) target = $region36
        $region35: #{tpu_custom_call.1} parent=27 // pred_region
          %197 = dma.done %s190, 32
        $region36: #{tpu_custom_call.1} parent=27 // pred_fallthru
          _
        %s198 = sand.u32 %s44, 1
        %s199 = scalar_lea.sflag [#allocation3], %s198
        %s200 = sand.u32 %s44, 1
        %s201 = smul.addr %s200, 8
        %s202 = scalar_lea.vmem [#allocation2], %s201
        %p203 = pneg %p57
        %p204 = pneg %p54
        %s205 = sand.u32 %s72, 1
        %s206 = scalar_lea.sflag [#allocation6], %s205
        %s207 = sand.u32 %s72, 1
        %s208 = smul.addr %s207, 2
        %s209 = scalar_lea.vmem [#allocation5], %s208
        %p210 = pneg %p85
        %p211 = pneg %p82
        %p212 = pneg %p113
        %p213 = pneg %p110
        %s214 = sand.u32 %s100, 1
        %s215 = scalar_lea.sflag [#allocation4], %s214
        %s216 = sand.u32 %s100, 1
        %s217 = smul.addr %s216, 2
        %s218 = scalar_lea.vmem [#allocation7], %s217
        %v219 = vld [vmem:[%s184] sm:$0x3]
        %v220 = vld [vmem:[%s184 + $0x2] sm:$0x3]
        %v221 = vld [vmem:[%s184 + $0x4] sm:$0x3]
        %v222 = vld [vmem:[%s184 + $0x6] sm:$0x3]
        %v223 = vld [vmem:[%s193] sm:$0x3]
        %vm224 = vcmask 1041408
        %v225 = vsel %vm224, %v219, -inf
        %v226 = vsel %vm224, %v220, -inf
        %v227 = vsel %vm224, %v221, -inf
        %v228 = vsel %vm224, %v222, -inf
        %v229 = vmax.f32 %v225, %v226
        %v230 = vmax.f32 %v227, %v228
        %v231 = vmax.f32 %v229, %v230
        %v232 = vsub.f32 %v219, %v231
        %v233 = vsub.f32 %v220, %v231
        %v234 = vsub.f32 %v221, %v231
        %v235 = vsub.f32 %v222, %v231
        %v236 = vmul.f32 %v232, 1.442695
        %v237 = vpow.pop %v236
        %v238 = vmul.f32 %v233, 1.442695
        %v239 = vpow.pop %v238
        %v240 = vmul.f32 %v234, 1.442695
        %v241 = vpow.pop %v240
        %v242 = vmul.f32 %v235, 1.442695
        %v243 = vpow.pop %v242
        %v244 = vsel %vm224, %v237, 0.0
        %v245 = vsel %vm224, %v239, 0.0
        %v246 = vadd.f32 %v244, %v245
        %v247 = vsel %vm224, %v241, 0.0
        %v248 = vadd.f32 %v246, %v247
        %v249 = vsel %vm224, %v243, 0.0
        %v250 = vadd.f32 %v248, %v249
        %v251 = vlog2.pop %v250
        %v252 = vmul.f32 %v251, 0.6931472
        %v253 = vadd.f32 %v231, %v252
        %vm254 = vcmp.eq.s32.totalorder %v223, 0
        %vm255 = vcmp.eq.s32.totalorder %v223, 1
        %vm256 = vcmp.eq.s32.totalorder %v223, 2
        %vm257 = vcmp.eq.s32.totalorder %v223, 3
        %v258 = vsel %vm254, %v219, 0.0
        %v259 = vsel %vm255, %v220, 0.0
        %v260 = vsel %vm256, %v221, 0.0
        %v261 = vsel %vm257, %v222, 0.0
        %v262 = vsel %vm224, %v258, 0.0
        %v263 = vsel %vm224, %v259, 0.0
        %v264 = vadd.f32 %v262, %v263
        %v265 = vsel %vm224, %v260, 0.0
        %v266 = vadd.f32 %v264, %v265
        %v267 = vsel %vm224, %v261, 0.0
        %v268 = vadd.f32 %v266, %v267
        %v269 = vsub.f32 %v253, %v268
        %v270 = vsub.f32 0.0, %v269
        %v271 = vmul.f32 %v270, 1.442695
        %v272 = vpow.pop %v271
        %v273 = vsub.f32 1.0, %v272
        %v274 = vmul.f32 %v273, %v273
        %v275 = vmul.f32 %v274, %v269
        %276 = vst [vmem:[%s218] sm:$0x3] %v275
        %s277 = sand.u32 %s100, 1
        %s278 = scalar_lea.sflag [#allocation4], %s277
        %s279 = sand.u32 %s100, 1
        %s280 = smul.addr %s279, 2
        %s281 = scalar_lea.vmem [#allocation7], %s280
        // Predicated region
        $region37: #{tpu_custom_call.1} parent=27 // pred_check
          %p282 = pneg %p110
        $region38: #{tpu_custom_call.1} parent=27 // pred_check_branch
          %284 = sbr.rel (%p282) target = $region40
        $region39: #{tpu_custom_call.1} parent=27 // pred_region
          %s286 = ssub.s32 32, 32
          %287 = vsyncadd %s278, %s286
          %s288 = sadd.s32 %s27, %s26
          %s289 = smul.addr %s288, 32
          %s290 = scalar_lea.hbm %s2, %s289
          %s292 = sshll.u32 %s281, 4
          %s293 = int_to_ptr.vmem [resolvable:$true] %s292
          %295 = dma.vmem_to_hbm [thread:$0]  %s293, 32, %s290, %s278
        $region40: #{tpu_custom_call.1} parent=27 // pred_fallthru
          _
      $region28: #{tpu_custom_call.1} parent=5 // pred_fallthru
        _
      %p296 = scmp.le.s32.totalorder 2, %s17
      // Predicated region
      $region41: #{tpu_custom_call.1} parent=5 // pred_check
        %p297 = pneg %p296
      $region42: #{tpu_custom_call.1} parent=5 // pred_check_branch
        %299 = sbr.rel (%p297) target = $region44
      $region43: #{tpu_custom_call.1} parent=5 // pred_region
        %s300 = ssub.s32 %s17, 2
        // Predicated region
        $region45: #{tpu_custom_call.1} parent=43 // pred_check
          %p301 = pneg %p116
        $region46: #{tpu_custom_call.1} parent=43 // pred_check_branch
          %303 = sbr.rel (%p301) target = $region48
        $region47: #{tpu_custom_call.1} parent=43 // pred_region
          %s304 = sand.u32 %s101, 1
          %s305 = scalar_lea.sflag [#allocation4], %s304
          %s306 = sand.u32 %s101, 1
          %s307 = smul.addr %s306, 2
          %s308 = scalar_lea.vmem [#allocation7], %s307
          %309 = dma.done %s305, 32
        $region48: #{tpu_custom_call.1} parent=43 // pred_fallthru
          _
      $region44: #{tpu_custom_call.1} parent=5 // pred_fallthru
        _
    $region6: #{tpu_custom_call.1} parent=1 // loop_footer
      %s21 = sadd.s32 1, %s17
    $region7: #{tpu_custom_call.1} parent=1 // loop_footer_branch
      %16 = sbr.rel target = $region3
    $region8: #{tpu_custom_call.1} parent=1 // loop_exit
      _
    %310 = vsyncpa [#allocation3], 1
    %s311 = scalar_lea.sflag [#allocation3], 1
    %312 = vsyncpa %s311, 1
    %313 = vsyncpa [#allocation6], 1
    %s314 = scalar_lea.sflag [#allocation6], 1
    %315 = vsyncpa %s314, 1
    %316 = vsyncpa [#allocation4], 1
    %s317 = scalar_lea.sflag [#allocation4], 1
    %318 = vsyncpa %s317, 1

</llo_original>
